<compile_context>
chip_gen: v6e
topology: v6e:2x2x1
jax: 0.10.0
libtpu: 0.0.40
codegen_flags: <defaults>
</compile_context>

<pallas_src>
import jax
import jax.numpy as jnp
from jax.experimental import pallas as pl
from jax.experimental.pallas import tpu as pltpu


def _round_up(x, m):
    return ((x + m - 1) // m) * m


def _num_tensorcores():
    """Best-effort detection of TensorCores per chip (2 on v7x-class chips)."""
    try:
        kind = jax.devices()[0].device_kind.lower()
        return 2 if "v7" in kind else 1
    except Exception:  # pragma: no cover
        return 1


def _choose_batch_tile(B, num_tc):
    """MXU-friendly batch tile: multiple of 8 sublanes, <= 256 rows."""
    b8 = _round_up(max(B, 1), 8)
    if b8 > 256:
        return 256
    if num_tc >= 2 and b8 > 128:
        # Split so both v7x TensorCores get a tile.
        return _round_up(pl.cdiv(b8, 2), 8)
    # Single-TC chips (v5e/v6e): one tile = one grid step = lowest overhead.
    return b8


def decoder_cvae_kernel(z_ref, w1_ref, b1_ref, w2_ref, b2_ref, w3_ref, b3_ref,
                        out_ref):
    # Cast z to the MXU input dtype inside the kernel (fused; hides under DMA).
    w_dtype = w1_ref.dtype
    z = z_ref[...].astype(w_dtype)

    a1 = jnp.dot(z, w1_ref[...],
                 preferred_element_type=jnp.float32) + b1_ref[...]
    z1 = jnp.maximum(a1, 0.0).astype(w_dtype)

    a2 = jnp.dot(z1, w2_ref[...],
                 preferred_element_type=jnp.float32) + b2_ref[...]
    z2 = jnp.maximum(a2, 0.0).astype(w_dtype)

    out_ref[...] = (jnp.dot(z2, w3_ref[...],
                            preferred_element_type=jnp.float32)
                    + b3_ref[...]).astype(out_ref.dtype)


def prepare_decoder_params(params, compute_dtype=jnp.bfloat16):
    """One-time (off the hot path) weight prep:
      * zero-pad hidden dims to multiples of 128 (lane-dense intermediates,
        exact no-op: padded W cols are 0, padded b entries are 0, ReLU(0)=0,
        padded W rows of the next layer are 0),
      * cast weights to the MXU compute dtype, biases to f32."""
    w1, b1, w2, b2, w3, b3 = params
    h1, h0 = w1.shape[1], w2.shape[1]
    h1p = max(_round_up(h1, 128), 128)
    h0p = max(_round_up(h0, 128), 128)

    def pad_to(a, shape):
        pads = [(0, t - s) for s, t in zip(a.shape, shape)]
        return a if all(p == (0, 0) for p in pads) else jnp.pad(a, pads)

    w1p = pad_to(w1, (w1.shape[0], h1p)).astype(compute_dtype)
    b1p = pad_to(b1, (1, h1p)).astype(jnp.float32)
    w2p = pad_to(w2, (h1p, h0p)).astype(compute_dtype)
    b2p = pad_to(b2, (1, h0p)).astype(jnp.float32)
    w3p = pad_to(w3, (h0p, w3.shape[1])).astype(compute_dtype)
    b3p = b3.astype(jnp.float32)
    return (w1p, b1p, w2p, b2p, w3p, b3p)


def decoder_cvae_forward(z, prepared, *, batch_tile=None):
    """z: (B, latent + num_params) float32. prepared: prepare_decoder_params(...).
    Returns (B, N) float32. No pad/cast/slice ops on z or the output."""
    w1, b1, w2, b2, w3, b3 = prepared
    B, d_in = z.shape
    assert w1.shape[0] == d_in
    h1p = w1.shape[1]
    h0p = w2.shape[1]
    N = w3.shape[1]

    if batch_tile is None:
        batch_tile = _choose_batch_tile(B, _num_tensorcores())
    batch_tile = max(8, _round_up(batch_tile, 8))

    grid_len = pl.cdiv(B, batch_tile)   # ragged last block handled by Pallas
    grid = (grid_len,)

    def batch_map(i):
        return (i, 0)

    def const_map(i):
        return (0, 0)

    def const_spec(shape):
        # Weights/biases never change across grid steps: single buffer.
        return pl.BlockSpec(shape, const_map, pipeline_mode=pl.Buffered(1))

    # z double-buffering only pays off when the grid is long enough to overlap.
    z_mode = pl.Buffered(2) if grid_len > 2 else pl.Buffered(1)

    flops = 2 * B * (d_in * h1p + h1p * h0p + h0p * N)
    bytes_accessed = int(
        z.size * z.dtype.itemsize
        + sum(a.size * a.dtype.itemsize for a in prepared)
        + B * N * 4)

    # TODO(synk): on v7x, verify in a profile that the batch grid axis actually
    # shards across both TensorCores with "parallel"; if not, switch this axis
    # to pltpu.CORE_PARALLEL (or pl.core_map over create_tensorcore_mesh).
    out = pl.pallas_call(
        decoder_cvae_kernel,
        out_shape=jax.ShapeDtypeStruct((B, N), jnp.float32),
        grid_spec=pl.GridSpec(
            grid=grid,
            in_specs=[
                pl.BlockSpec((batch_tile, d_in), batch_map,
                             pipeline_mode=z_mode),        # z tile (f32)
                const_spec((d_in, h1p)),                   # W1 (in, out)
                const_spec((1, h1p)),                      # b1
                const_spec((h1p, h0p)),                    # W2
                const_spec((1, h0p)),                      # b2
                const_spec((h0p, N)),                      # W3
                const_spec((1, N)),                        # b3
            ],
            out_specs=pl.BlockSpec((batch_tile, N), batch_map),
        ),
        compiler_params=pltpu.CompilerParams(
            dimension_semantics=("parallel",)),
        cost_estimate=pl.CostEstimate(flops=flops, transcendentals=0,
                                      bytes_accessed=bytes_accessed),
    )(z, w1, b1, w2, b2, w3, b3)

    return out


def init_decoder_params(key, N, num_params, latent, hidden_dims):
    """Deterministic init matching the nn.Linear shapes of DecoderCVAE.
    Weights are returned pre-transposed to (in, out)."""
    d_in = latent + num_params
    h1 = hidden_dims[1]
    h0 = hidden_dims[0]
    ks = jax.random.split(key, 6)

    def uniform_linear(kw, kb, fan_in, fan_out):
        # PyTorch default init: U(-1/sqrt(fan_in), 1/sqrt(fan_in))
        bound = 1.0 / jnp.sqrt(jnp.float32(fan_in))
        w = jax.random.uniform(kw, (fan_in, fan_out), jnp.float32,
                               minval=-bound, maxval=bound)
        b = jax.random.uniform(kb, (1, fan_out), jnp.float32,
                               minval=-bound, maxval=bound)
        return w, b

    w1, b1 = uniform_linear(ks[0], ks[1], d_in, h1)
    w2, b2 = uniform_linear(ks[2], ks[3], h1, h0)
    w3, b3 = uniform_linear(ks[4], ks[5], h0, N)
    return (w1, b1, w2, b2, w3, b3)


def decoder_cvae_reference(z, params, compute_dtype=jnp.float32):
    """Pure-JAX reference mirroring the kernel's dtype path (unpadded)."""
    w1, b1, w2, b2, w3, b3 = params
    zc = z.astype(compute_dtype)
    w1c = w1.astype(compute_dtype)
    w2c = w2.astype(compute_dtype)
    w3c = w3.astype(compute_dtype)
    a1 = jnp.dot(zc, w1c, preferred_element_type=jnp.float32) + b1
    z1 = jnp.maximum(a1, 0.0).astype(compute_dtype)
    a2 = jnp.dot(z1, w2c, preferred_element_type=jnp.float32) + b2
    z2 = jnp.maximum(a2, 0.0).astype(compute_dtype)
    return jnp.dot(z2, w3c, preferred_element_type=jnp.float32) + b3


if __name__ == "__main__":
    # Small shapes consistent with the module's constructor.
    N = 256                  # output size
    num_params = 8
    latent = 8
    hidden_dims = [64, 128]  # l1 -> hidden_dims[1], l2 -> hidden_dims[0]
    B = 16                   # batch

    key = jax.random.PRNGKey(0)
    kz, kp = jax.random.split(key)
    z = jax.random.normal(kz, (B, latent + num_params), jnp.float32)
    params = init_decoder_params(kp, N, num_params, latent, hidden_dims)

    # Prepare weights once (pad hidden dims to 128, cast) — off the hot path.
    prep_f32 = prepare_decoder_params(params, compute_dtype=jnp.float32)
    prep_bf16 = prepare_decoder_params(params, compute_dtype=jnp.bfloat16)

    # 1) f32 path: exact (zero-padding is a mathematical no-op).
    out_f32 = jax.block_until_ready(decoder_cvae_forward(z, prep_f32))
    ref_f32 = decoder_cvae_reference(z, params, compute_dtype=jnp.float32)
    assert out_f32.shape == (B, N)
    assert jnp.allclose(out_f32, ref_f32, atol=1e-4, rtol=1e-4)

    # 2) bf16 MXU path (default): compare against a bf16-emulating reference,
    #    plus a looser sanity check against the pure f32 reference.
    out_bf16 = jax.block_until_ready(decoder_cvae_forward(z, prep_bf16))
    ref_bf16 = decoder_cvae_reference(z, params, compute_dtype=jnp.bfloat16)
    assert out_bf16.shape == (B, N)
    assert jnp.allclose(out_bf16, ref_bf16, atol=2e-2, rtol=2e-2)
    assert jnp.allclose(out_bf16, ref_f32, atol=5e-2, rtol=5e-2)

    # 3) Non-divisible batch: ragged last block (no wrapper pad/slice).
    B2 = 13
    z2 = jax.random.normal(jax.random.PRNGKey(1),
                           (B2, latent + num_params), jnp.float32)
    out2 = jax.block_until_ready(decoder_cvae_forward(z2, prep_f32))
    ref2 = decoder_cvae_reference(z2, params, compute_dtype=jnp.float32)
    assert out2.shape == (B2, N)
    assert jnp.allclose(out2, ref2, atol=1e-4, rtol=1e-4)

    # 4) Larger non-divisible batch: multi-step grid + ragged last block.
    B3 = 300
    z3 = jax.random.normal(jax.random.PRNGKey(2),
                           (B3, latent + num_params), jnp.float32)
    out3 = jax.block_until_ready(decoder_cvae_forward(z3, prep_f32))
    ref3 = decoder_cvae_reference(z3, params, compute_dtype=jnp.float32)
    assert out3.shape == (B3, N)
    assert jnp.allclose(out3, ref3, atol=1e-4, rtol=1e-4)

    print("KERNEL_OK")
</pallas_src>

<mosaic_0001>
module attributes {stable_mosaic.version = 11 : i64} {
  func.func @decoder_cvae_kernel(%arg0: i32, %arg1: memref<16x16xf32, #tpu.memory_space<vmem>>, %arg2: memref<16x128xf32, #tpu.memory_space<vmem>>, %arg3: memref<1x128xf32, #tpu.memory_space<vmem>>, %arg4: memref<128x128xf32, #tpu.memory_space<vmem>>, %arg5: memref<1x128xf32, #tpu.memory_space<vmem>>, %arg6: memref<128x256xf32, #tpu.memory_space<vmem>>, %arg7: memref<1x256xf32, #tpu.memory_space<vmem>>, %arg8: memref<16x256xf32, #tpu.memory_space<vmem>>) attributes {dimension_semantics = [#tpu.dimension_semantics<parallel>], iteration_bounds = array<i64: 1>, scalar_prefetch = 0 : i64, scratch_operands = 0 : i64, tpu.core_type = #tpu.core_type<tc>, window_params = [{pipeline_mode = #tpu.pipeline_mode<synchronous>, transform_indices = @transform_0, window_bounds = array<i64: 16, 16>}, {pipeline_mode = #tpu.pipeline_mode<synchronous>, transform_indices = @transform_1, window_bounds = array<i64: 16, 128>}, {pipeline_mode = #tpu.pipeline_mode<synchronous>, transform_indices = @transform_2, window_bounds = array<i64: 1, 128>}, {pipeline_mode = #tpu.pipeline_mode<synchronous>, transform_indices = @transform_3, window_bounds = array<i64: 128, 128>}, {pipeline_mode = #tpu.pipeline_mode<synchronous>, transform_indices = @transform_4, window_bounds = array<i64: 1, 128>}, {pipeline_mode = #tpu.pipeline_mode<synchronous>, transform_indices = @transform_5, window_bounds = array<i64: 128, 256>}, {pipeline_mode = #tpu.pipeline_mode<synchronous>, transform_indices = @transform_6, window_bounds = array<i64: 1, 256>}, {transform_indices = @transform_7, window_bounds = array<i64: 16, 256>}]} {
    %c0 = arith.constant 0 : index
    %c0_0 = arith.constant 0 : index
    %0 = vector.load %arg1[%c0, %c0_0] : memref<16x16xf32, #tpu.memory_space<vmem>>, vector<16x16xf32>
    %c0_1 = arith.constant 0 : index
    %c0_2 = arith.constant 0 : index
    %1 = vector.load %arg2[%c0_1, %c0_2] : memref<16x128xf32, #tpu.memory_space<vmem>>, vector<16x128xf32>
    %cst = arith.constant dense<0.000000e+00> : vector<16x128xf32>
    %2 = tpu.matmul %0, %1, %cst {dimension_numbers = #tpu.dot_dimension_numbers<[1], [0], [0], [1], [0, 0, 1, 1], [], []>} : vector<16x16xf32>, vector<16x128xf32>, vector<16x128xf32> -> vector<16x128xf32>
    %c0_3 = arith.constant 0 : index
    %c0_4 = arith.constant 0 : index
    %3 = vector.load %arg3[%c0_3, %c0_4] : memref<1x128xf32, #tpu.memory_space<vmem>>, vector<1x128xf32>
    %4 = vector.broadcast %3 : vector<1x128xf32> to vector<16x128xf32>
    %5 = arith.addf %2, %4 : vector<16x128xf32>
    %cst_5 = arith.constant 0.000000e+00 : f32
    %6 = vector.broadcast %cst_5 : f32 to vector<16x128xf32>
    %7 = arith.maximumf %5, %6 : vector<16x128xf32>
    %c0_6 = arith.constant 0 : index
    %c0_7 = arith.constant 0 : index
    %8 = vector.load %arg4[%c0_6, %c0_7] : memref<128x128xf32, #tpu.memory_space<vmem>>, vector<128x128xf32>
    %cst_8 = arith.constant dense<0.000000e+00> : vector<16x128xf32>
    %9 = tpu.matmul %7, %8, %cst_8 {dimension_numbers = #tpu.dot_dimension_numbers<[1], [0], [0], [1], [0, 0, 1, 1], [], []>} : vector<16x128xf32>, vector<128x128xf32>, vector<16x128xf32> -> vector<16x128xf32>
    %c0_9 = arith.constant 0 : index
    %c0_10 = arith.constant 0 : index
    %10 = vector.load %arg5[%c0_9, %c0_10] : memref<1x128xf32, #tpu.memory_space<vmem>>, vector<1x128xf32>
    %11 = vector.broadcast %10 : vector<1x128xf32> to vector<16x128xf32>
    %12 = arith.addf %9, %11 : vector<16x128xf32>
    %cst_11 = arith.constant 0.000000e+00 : f32
    %13 = vector.broadcast %cst_11 : f32 to vector<16x128xf32>
    %14 = arith.maximumf %12, %13 : vector<16x128xf32>
    %c0_12 = arith.constant 0 : index
    %c0_13 = arith.constant 0 : index
    %15 = vector.load %arg6[%c0_12, %c0_13] : memref<128x256xf32, #tpu.memory_space<vmem>>, vector<128x256xf32>
    %cst_14 = arith.constant dense<0.000000e+00> : vector<16x256xf32>
    %16 = tpu.matmul %14, %15, %cst_14 {dimension_numbers = #tpu.dot_dimension_numbers<[1], [0], [0], [1], [0, 0, 1, 1], [], []>} : vector<16x128xf32>, vector<128x256xf32>, vector<16x256xf32> -> vector<16x256xf32>
    %c0_15 = arith.constant 0 : index
    %c0_16 = arith.constant 0 : index
    %17 = vector.load %arg7[%c0_15, %c0_16] : memref<1x256xf32, #tpu.memory_space<vmem>>, vector<1x256xf32>
    %18 = vector.broadcast %17 : vector<1x256xf32> to vector<16x256xf32>
    %19 = arith.addf %16, %18 : vector<16x256xf32>
    %c0_17 = arith.constant 0 : index
    %c0_18 = arith.constant 0 : index
    %20 = vector.load %arg8[%c0_17, %c0_18] : memref<16x256xf32, #tpu.memory_space<vmem>>, vector<16x256xf32>
    tpu.vector_store %arg8[%c0_17, %c0_18], %19 {strides = array<i32>} : memref<16x256xf32, #tpu.memory_space<vmem>>, vector<16x256xf32>,
    return
  }
  func.func @transform_0(%arg0: i32) -> (i32, i32) {
    %c0_i32 = arith.constant 0 : i32
    %c0_i32_0 = arith.constant 0 : i32
    return %arg0, %c0_i32 : i32, i32
  }
  func.func @transform_1(%arg0: i32) -> (i32, i32) {
    %c0_i32 = arith.constant 0 : i32
    %c0_i32_0 = arith.constant 0 : i32
    %c0_i32_1 = arith.constant 0 : i32
    return %c0_i32, %c0_i32_0 : i32, i32
  }
  func.func @transform_2(%arg0: i32) -> (i32, i32) {
    %c0_i32 = arith.constant 0 : i32
    %c0_i32_0 = arith.constant 0 : i32
    %c0_i32_1 = arith.constant 0 : i32
    return %c0_i32, %c0_i32_0 : i32, i32
  }
  func.func @transform_3(%arg0: i32) -> (i32, i32) {
    %c0_i32 = arith.constant 0 : i32
    %c0_i32_0 = arith.constant 0 : i32
    %c0_i32_1 = arith.constant 0 : i32
    return %c0_i32, %c0_i32_0 : i32, i32
  }
  func.func @transform_4(%arg0: i32) -> (i32, i32) {
    %c0_i32 = arith.constant 0 : i32
    %c0_i32_0 = arith.constant 0 : i32
    %c0_i32_1 = arith.constant 0 : i32
    return %c0_i32, %c0_i32_0 : i32, i32
  }
  func.func @transform_5(%arg0: i32) -> (i32, i32) {
    %c0_i32 = arith.constant 0 : i32
    %c0_i32_0 = arith.constant 0 : i32
    %c0_i32_1 = arith.constant 0 : i32
    return %c0_i32, %c0_i32_0 : i32, i32
  }
  func.func @transform_6(%arg0: i32) -> (i32, i32) {
    %c0_i32 = arith.constant 0 : i32
    %c0_i32_0 = arith.constant 0 : i32
    %c0_i32_1 = arith.constant 0 : i32
    return %c0_i32, %c0_i32_0 : i32, i32
  }
  func.func @transform_7(%arg0: i32) -> (i32, i32) {
    %c0_i32 = arith.constant 0 : i32
    %c0_i32_0 = arith.constant 0 : i32
    return %arg0, %c0_i32 : i32, i32
  }
}

</mosaic_0001>

<llo_original>
// kernel: tpu_custom_call.1
$region0: #{tpu_custom_call.1}
  #allocation0 [shape = 'u32[]', space=smem, size = 0x4, offset = 0x4, fixed_abs, tag = 'smem constant byte address 0x4 - core index']
  #allocation1 [shape = 'u32[144,128]{1,0:T(1,128)}', space=vmem, size = 0x12000, scoped, tag = 'internal scratch']
  %s0 = inlined_call_operand.hbm [shape: f32[16,16], index: 0, kind: input, shape index: {}]
  %s1 = inlined_call_operand.hbm [shape: f32[16,128], index: 1, kind: input, shape index: {}]
  %s2 = inlined_call_operand.vmem [shape: f32[1,128], index: 2, kind: input, shape index: {}]
  %s3 = inlined_call_operand.hbm [shape: f32[128,128], index: 3, kind: input, shape index: {}]
  %s4 = inlined_call_operand.vmem [shape: f32[1,128], index: 4, kind: input, shape index: {}]
  %s5 = inlined_call_operand.hbm [shape: f32[128,256], index: 5, kind: input, shape index: {}]
  %s6 = inlined_call_operand.vmem [shape: f32[1,256], index: 6, kind: input, shape index: {}]
  %s7 = inlined_call_operand.hbm [shape: f32[16,256], index: 7, kind: output, shape index: {}]
  %s8 = sld [smem:[#allocation0]]
  $region54: #{tpu_custom_call.1} parent=0
    _
  %s10 = ssub.s32 1, %s8
  %s11 = scalar_select 0, %s10, %s8
  $region1: #{tpu_custom_call.1} parent=0
    #allocation2 [shape = 'u8[8192]{0}', space=vmem, size = 0x2000, scoped, tag = 'input window, operand 0, single buffered']
    #allocation3 [shape = 's32[1]{0}', space=sflag, size = 0x4, scoped, tag = 'scoped memory for tpu_custom_call.1']
    #allocation4 [shape = 's32[1]{0}', space=sflag, size = 0x4, scoped, tag = 'scoped memory for tpu_custom_call.1']
    #allocation5 [shape = 'u8[8192]{0}', space=vmem, size = 0x2000, scoped, tag = 'input window, operand 1, single buffered']
    #allocation6 [shape = 's32[1]{0}', space=sflag, size = 0x4, scoped, tag = 'scoped memory for tpu_custom_call.1']
    #allocation7 [shape = 'u8[65536]{0}', space=vmem, size = 0x10000, scoped, tag = 'input window, operand 3, single buffered']
    #allocation8 [shape = 'u8[131072]{0}', space=vmem, size = 0x20000, scoped, tag = 'input window, operand 5, single buffered']
    #allocation9 [shape = 's32[1]{0}', space=sflag, size = 0x4, scoped, tag = 'scoped memory for tpu_custom_call.1']
    #allocation10 [shape = 'u8[16384]{0}', space=vmem, size = 0x4000, scoped, tag = 'output window, operand 0, single buffered']
    %12 = vsyncpa [#allocation3], 0
    %13 = vsyncpa [#allocation6], 0
    %14 = vsyncpa [#allocation9], 0
    %15 = vsyncpa [#allocation4], 0
    // Predicated region
    $region2: #{tpu_custom_call.1} parent=1 // pred_check
      _
    $region3: #{tpu_custom_call.1} parent=1 // pred_check_branch
      %17 = sbr.rel (0) target = $region5
    $region4: #{tpu_custom_call.1} parent=1 // pred_region
      %s19 = ssub.s32 256, 256
      %20 = vsyncadd [#allocation3], %s19
      %s21 = sshll.u32 [#allocation2], 4
      %s22 = int_to_ptr.vmem [resolvable:$true] %s21
      %27 = dma.hbm_to_vmem [thread:$0]  %s0, 256, %s22, [#allocation3], 128, 128, 8
    $region5: #{tpu_custom_call.1} parent=1 // pred_fallthru
      _
    // Predicated region
    $region6: #{tpu_custom_call.1} parent=1 // pred_check
      _
    $region7: #{tpu_custom_call.1} parent=1 // pred_check_branch
      %29 = sbr.rel (0) target = $region9
    $region8: #{tpu_custom_call.1} parent=1 // pred_region
      %s31 = ssub.s32 256, 256
      %32 = vsyncadd [#allocation6], %s31
      %s33 = sshll.u32 [#allocation5], 4
      %s34 = int_to_ptr.vmem [resolvable:$true] %s33
      %39 = dma.hbm_to_vmem [thread:$0]  %s1, 256, %s34, [#allocation6], 128, 128, 8
    $region9: #{tpu_custom_call.1} parent=1 // pred_fallthru
      _
    // Predicated region
    $region10: #{tpu_custom_call.1} parent=1 // pred_check
      _
    $region11: #{tpu_custom_call.1} parent=1 // pred_check_branch
      %41 = sbr.rel (0) target = $region13
    $region12: #{tpu_custom_call.1} parent=1 // pred_region
      _
    $region13: #{tpu_custom_call.1} parent=1 // pred_fallthru
      _
    // Predicated region
    $region14: #{tpu_custom_call.1} parent=1 // pred_check
      _
    $region15: #{tpu_custom_call.1} parent=1 // pred_check_branch
      %43 = sbr.rel (0) target = $region17
    $region16: #{tpu_custom_call.1} parent=1 // pred_region
      %s45 = ssub.s32 2048, 2048
      %46 = vsyncadd [#allocation6], %s45
      %s47 = sshll.u32 [#allocation7], 4
      %s48 = int_to_ptr.vmem [resolvable:$true] %s47
      %53 = dma.hbm_to_vmem [thread:$0]  %s3, 2048, %s48, [#allocation6], 128, 128, 8
    $region17: #{tpu_custom_call.1} parent=1 // pred_fallthru
      _
    // Predicated region
    $region18: #{tpu_custom_call.1} parent=1 // pred_check
      _
    $region19: #{tpu_custom_call.1} parent=1 // pred_check_branch
      %55 = sbr.rel (0) target = $region21
    $region20: #{tpu_custom_call.1} parent=1 // pred_region
      _
    $region21: #{tpu_custom_call.1} parent=1 // pred_fallthru
      _
    // Predicated region
    $region22: #{tpu_custom_call.1} parent=1 // pred_check
      _
    $region23: #{tpu_custom_call.1} parent=1 // pred_check_branch
      %57 = sbr.rel (0) target = $region25
    $region24: #{tpu_custom_call.1} parent=1 // pred_region
      %s59 = ssub.s32 4096, 4096
      %60 = vsyncadd [#allocation9], %s59
      %s61 = sshll.u32 [#allocation8], 4
      %s62 = int_to_ptr.vmem [resolvable:$true] %s61
      %67 = dma.hbm_to_vmem [thread:$0]  %s5, 4096, %s62, [#allocation9], 256, 256, 16
    $region25: #{tpu_custom_call.1} parent=1 // pred_fallthru
      _
    // Predicated region
    $region26: #{tpu_custom_call.1} parent=1 // pred_check
      _
    $region27: #{tpu_custom_call.1} parent=1 // pred_check_branch
      %69 = sbr.rel (0) target = $region29
    $region28: #{tpu_custom_call.1} parent=1 // pred_region
      _
    $region29: #{tpu_custom_call.1} parent=1 // pred_fallthru
      _
    // Predicated region
    $region30: #{tpu_custom_call.1} parent=1 // pred_check
      _
    $region31: #{tpu_custom_call.1} parent=1 // pred_check_branch
      %71 = sbr.rel (0) target = $region33
    $region32: #{tpu_custom_call.1} parent=1 // pred_region
      %72 = dma.done [#allocation3], 256
    $region33: #{tpu_custom_call.1} parent=1 // pred_fallthru
      _
    // Predicated region
    $region34: #{tpu_custom_call.1} parent=1 // pred_check
      _
    $region35: #{tpu_custom_call.1} parent=1 // pred_check_branch
      %74 = sbr.rel (0) target = $region37
    $region36: #{tpu_custom_call.1} parent=1 // pred_region
      %75 = dma.done [#allocation6], 256
    $region37: #{tpu_custom_call.1} parent=1 // pred_fallthru
      _
    // Predicated region
    $region38: #{tpu_custom_call.1} parent=1 // pred_check
      _
    $region39: #{tpu_custom_call.1} parent=1 // pred_check_branch
      %77 = sbr.rel (0) target = $region41
    $region40: #{tpu_custom_call.1} parent=1 // pred_region
      %78 = dma.done [#allocation6], 2048
    $region41: #{tpu_custom_call.1} parent=1 // pred_fallthru
      _
    // Predicated region
    $region42: #{tpu_custom_call.1} parent=1 // pred_check
      _
    $region43: #{tpu_custom_call.1} parent=1 // pred_check_branch
      %80 = sbr.rel (0) target = $region45
    $region44: #{tpu_custom_call.1} parent=1 // pred_region
      %81 = dma.done [#allocation9], 4096
    $region45: #{tpu_custom_call.1} parent=1 // pred_fallthru
      _
    %v82 = vld [vmem:[#allocation2] sm:$0xff]
    %v83 = vld [vmem:[#allocation2 + $0x8] sm:$0xff]
    %v84 = vld [vmem:[#allocation5] sm:$0xff]
    %v85 = vld [vmem:[#allocation5 + $0x8] sm:$0xff]
    %v86 = vld [vmem:[%s2] sm:$0x1]
    %v88 = vlaneseq
    %v89 = vshrl.u32 %v88, 7
    %v90 = vsub.s32 0, %v89
    %v91 = vrot.slane %v86, %v90
    %vm93 = vcmask 130048
    %v95 = vsel %vm93, %v82, 0
    %v98 = vsel %vm93, %v83, 0
    %100 = vmatprep.subr.mxu0 0.0
    %101 = vmatpush1.msra.mxu0 0.0
    %102 = vmatprep.subr.mxu0 0.0
    %103 = vmatpush1.msra.mxu0 0.0
    %104 = vmatprep.subr.mxu0 0.0
    %105 = vmatpush1.msra.mxu0 0.0
    %106 = vmatprep.subr.mxu0 0.0
    %107 = vmatpush1.msra.mxu0 0.0
    %108 = vmatprep.subr.mxu0 0.0
    %109 = vmatpush1.msra.mxu0 0.0
    %110 = vmatprep.subr.mxu0 0.0
    %111 = vmatpush1.msra.mxu0 0.0
    %112 = vmatprep.subr.mxu0 0.0
    %113 = vmatpush1.msra.mxu0 0.0
    %114 = vmatprep.subr.mxu0 0.0
    %115 = vmatpush1.msra.mxu0 0.0
    %116 = vmatprep.subr.mxu0 0.0
    %117 = vmatpush1.msra.mxu0 0.0
    %118 = vmatprep.subr.mxu0 0.0
    %119 = vmatpush1.msra.mxu0 0.0
    %120 = vmatprep.subr.mxu0 0.0
    %121 = vmatpush1.msra.mxu0 0.0
    %122 = vmatprep.subr.mxu0 0.0
    %123 = vmatpush1.msra.mxu0 0.0
    %124 = vmatprep.subr.mxu0 0.0
    %125 = vmatpush1.msra.mxu0 0.0
    %126 = vmatprep.subr.mxu0 0.0
    %127 = vmatpush1.msra.mxu0 0.0
    %128 = vmatprep.subr.mxu0 0.0
    %129 = vmatpush1.msra.mxu0 %v85
    %130 = vmatprep.subr.mxu0 0.0
    %131 = vmatpush1.msra.mxu0 %v84
    %132 = vmatprep.subr.mxu0 0.0
    %133 = vmatpush2.msra.mxu0 0.0
    %134 = vmatprep.subr.mxu0 0.0
    %135 = vmatpush2.msra.mxu0 0.0
    %136 = vmatprep.subr.mxu0 0.0
    %137 = vmatpush2.msra.mxu0 0.0
    %138 = vmatprep.subr.mxu0 0.0
    %139 = vmatpush2.msra.mxu0 0.0
    %140 = vmatprep.subr.mxu0 0.0
    %141 = vmatpush2.msra.mxu0 0.0
    %142 = vmatprep.subr.mxu0 0.0
    %143 = vmatpush2.msra.mxu0 0.0
    %144 = vmatprep.subr.mxu0 0.0
    %145 = vmatpush2.msra.mxu0 0.0
    %146 = vmatprep.subr.mxu0 0.0
    %147 = vmatpush2.msra.mxu0 0.0
    %148 = vmatprep.subr.mxu0 0.0
    %149 = vmatpush2.msra.mxu0 0.0
    %150 = vmatprep.subr.mxu0 0.0
    %151 = vmatpush2.msra.mxu0 0.0
    %152 = vmatprep.subr.mxu0 0.0
    %153 = vmatpush2.msra.mxu0 0.0
    %154 = vmatprep.subr.mxu0 0.0
    %155 = vmatpush2.msra.mxu0 0.0
    %156 = vmatprep.subr.mxu0 0.0
    %157 = vmatpush2.msra.mxu0 0.0
    %158 = vmatprep.subr.mxu0 0.0
    %159 = vmatpush2.msra.mxu0 0.0
    %160 = vmatprep.subr.mxu0 0.0
    %161 = vmatpush2.msra.mxu0 0.0
    %162 = vmatprep.subr.mxu0 0.0
    %163 = vmatpush2.msra.mxu0 0.0
    %164 = vmatprep.mubr.f32.mxu0 0.0
    %165 = vmatmul.mubr.f32.gmra.mxu0 %v95
    %v166 = vpop.f32.mrf.mxu0
    %v167 = vadd.f32 %v91, %v166
    %v168 = vpop.f32.mrf.mxu0
    %169 = vmatprep.mubr.f32.mxu0 0.0
    %170 = vmatmul.mubr.f32.gmra.mxu0 %v98
    %v171 = vpop.f32.mrf.mxu0
    %v172 = vadd.f32 %v91, %v171
    %v173 = vpop.f32.mrf.mxu0
    %174 = vdwg.mxu0
    %v175 = vmax.f32 %v167, 0.0
    %v176 = vmax.f32 %v172, 0.0
    %v177 = vld [vmem:[#allocation7] sm:$0xff]
    %v178 = vld [vmem:[#allocation7 + $0x8] sm:$0xff]
    %v179 = vld [vmem:[#allocation7 + $0x10] sm:$0xff]
    %v180 = vld [vmem:[#allocation7 + $0x18] sm:$0xff]
    %v181 = vld [vmem:[#allocation7 + $0x20] sm:$0xff]
    %v182 = vld [vmem:[#allocation7 + $0x28] sm:$0xff]
    %v183 = vld [vmem:[#allocation7 + $0x30] sm:$0xff]
    %v184 = vld [vmem:[#allocation7 + $0x38] sm:$0xff]
    %v185 = vld [vmem:[#allocation7 + $0x40] sm:$0xff]
    %v186 = vld [vmem:[#allocation7 + $0x48] sm:$0xff]
    %v187 = vld [vmem:[#allocation7 + $0x50] sm:$0xff]
    %v188 = vld [vmem:[#allocation7 + $0x58] sm:$0xff]
    %v189 = vld [vmem:[#allocation7 + $0x60] sm:$0xff]
    %v190 = vld [vmem:[#allocation7 + $0x68] sm:$0xff]
    %v191 = vld [vmem:[#allocation7 + $0x70] sm:$0xff]
    %v192 = vld [vmem:[#allocation7 + $0x78] sm:$0xff]
    %v193 = vld [vmem:[%s4] sm:$0x1]
    %v195 = vlaneseq
    %v196 = vshrl.u32 %v195, 7
    %v197 = vsub.s32 0, %v196
    %v198 = vrot.slane %v193, %v197
    %200 = vmatprep.subr.mxu0 0.0
    %201 = vmatpush1.msra.mxu0 %v192
    %202 = vmatprep.subr.mxu0 0.0
    %203 = vmatpush1.msra.mxu0 %v191
    %204 = vmatprep.subr.mxu0 0.0
    %205 = vmatpush1.msra.mxu0 %v190
    %206 = vmatprep.subr.mxu0 0.0
    %207 = vmatpush1.msra.mxu0 %v189
    %208 = vmatprep.subr.mxu0 0.0
    %209 = vmatpush1.msra.mxu0 %v188
    %210 = vmatprep.subr.mxu0 0.0
    %211 = vmatpush1.msra.mxu0 %v187
    %212 = vmatprep.subr.mxu0 0.0
    %213 = vmatpush1.msra.mxu0 %v186
    %214 = vmatprep.subr.mxu0 0.0
    %215 = vmatpush1.msra.mxu0 %v185
    %216 = vmatprep.subr.mxu0 0.0
    %217 = vmatpush1.msra.mxu0 %v184
    %218 = vmatprep.subr.mxu0 0.0
    %219 = vmatpush1.msra.mxu0 %v183
    %220 = vmatprep.subr.mxu0 0.0
    %221 = vmatpush1.msra.mxu0 %v182
    %222 = vmatprep.subr.mxu0 0.0
    %223 = vmatpush1.msra.mxu0 %v181
    %224 = vmatprep.subr.mxu0 0.0
    %225 = vmatpush1.msra.mxu0 %v180
    %226 = vmatprep.subr.mxu0 0.0
    %227 = vmatpush1.msra.mxu0 %v179
    %228 = vmatprep.subr.mxu0 0.0
    %229 = vmatpush1.msra.mxu0 %v178
    %230 = vmatprep.subr.mxu0 0.0
    %231 = vmatpush1.msra.mxu0 %v177
    %232 = vmatprep.subr.mxu0 0.0
    %233 = vmatpush2.msra.mxu0 0.0
    %234 = vmatprep.subr.mxu0 0.0
    %235 = vmatpush2.msra.mxu0 0.0
    %236 = vmatprep.subr.mxu0 0.0
    %237 = vmatpush2.msra.mxu0 0.0
    %238 = vmatprep.subr.mxu0 0.0
    %239 = vmatpush2.msra.mxu0 0.0
    %240 = vmatprep.subr.mxu0 0.0
    %241 = vmatpush2.msra.mxu0 0.0
    %242 = vmatprep.subr.mxu0 0.0
    %243 = vmatpush2.msra.mxu0 0.0
    %244 = vmatprep.subr.mxu0 0.0
    %245 = vmatpush2.msra.mxu0 0.0
    %246 = vmatprep.subr.mxu0 0.0
    %247 = vmatpush2.msra.mxu0 0.0
    %248 = vmatprep.subr.mxu0 0.0
    %249 = vmatpush2.msra.mxu0 0.0
    %250 = vmatprep.subr.mxu0 0.0
    %251 = vmatpush2.msra.mxu0 0.0
    %252 = vmatprep.subr.mxu0 0.0
    %253 = vmatpush2.msra.mxu0 0.0
    %254 = vmatprep.subr.mxu0 0.0
    %255 = vmatpush2.msra.mxu0 0.0
    %256 = vmatprep.subr.mxu0 0.0
    %257 = vmatpush2.msra.mxu0 0.0
    %258 = vmatprep.subr.mxu0 0.0
    %259 = vmatpush2.msra.mxu0 0.0
    %260 = vmatprep.subr.mxu0 0.0
    %261 = vmatpush2.msra.mxu0 0.0
    %262 = vmatprep.subr.mxu0 0.0
    %263 = vmatpush2.msra.mxu0 0.0
    %264 = vmatprep.mubr.f32.mxu0 0.0
    %265 = vmatmul.mubr.f32.gmra.mxu0 %v175
    %v266 = vpop.f32.mrf.mxu0
    %v267 = vadd.f32 %v198, %v266
    %v268 = vpop.f32.mrf.mxu0
    %269 = vmatprep.mubr.f32.mxu0 0.0
    %270 = vmatmul.mubr.f32.gmra.mxu0 %v176
    %v271 = vpop.f32.mrf.mxu0
    %v272 = vadd.f32 %v198, %v271
    %v273 = vpop.f32.mrf.mxu0
    %274 = vdwg.mxu0
    %v275 = vmax.f32 %v267, 0.0
    %v276 = vmax.f32 %v272, 0.0
    %v277 = vld [vmem:[#allocation8] sm:$0xff]
    %v278 = vld [vmem:[#allocation8 + $0x8] sm:$0xff]
    %v279 = vld [vmem:[#allocation8 + $0x10] sm:$0xff]
    %v280 = vld [vmem:[#allocation8 + $0x18] sm:$0xff]
    %v281 = vld [vmem:[#allocation8 + $0x20] sm:$0xff]
    %v282 = vld [vmem:[#allocation8 + $0x28] sm:$0xff]
    %v283 = vld [vmem:[#allocation8 + $0x30] sm:$0xff]
    %v284 = vld [vmem:[#allocation8 + $0x38] sm:$0xff]
    %v285 = vld [vmem:[#allocation8 + $0x40] sm:$0xff]
    %v286 = vld [vmem:[#allocation8 + $0x48] sm:$0xff]
    %v287 = vld [vmem:[#allocation8 + $0x50] sm:$0xff]
    %v288 = vld [vmem:[#allocation8 + $0x58] sm:$0xff]
    %v289 = vld [vmem:[#allocation8 + $0x60] sm:$0xff]
    %v290 = vld [vmem:[#allocation8 + $0x68] sm:$0xff]
    %v291 = vld [vmem:[#allocation8 + $0x70] sm:$0xff]
    %v292 = vld [vmem:[#allocation8 + $0x78] sm:$0xff]
    %v293 = vld [vmem:[#allocation8 + $0x80] sm:$0xff]
    %v294 = vld [vmem:[#allocation8 + $0x88] sm:$0xff]
    %v295 = vld [vmem:[#allocation8 + $0x90] sm:$0xff]
    %v296 = vld [vmem:[#allocation8 + $0x98] sm:$0xff]
    %v297 = vld [vmem:[#allocation8 + $0xa0] sm:$0xff]
    %v298 = vld [vmem:[#allocation8 + $0xa8] sm:$0xff]
    %v299 = vld [vmem:[#allocation8 + $0xb0] sm:$0xff]
    %v300 = vld [vmem:[#allocation8 + $0xb8] sm:$0xff]
    %v301 = vld [vmem:[#allocation8 + $0xc0] sm:$0xff]
    %v302 = vld [vmem:[#allocation8 + $0xc8] sm:$0xff]
    %v303 = vld [vmem:[#allocation8 + $0xd0] sm:$0xff]
    %v304 = vld [vmem:[#allocation8 + $0xd8] sm:$0xff]
    %v305 = vld [vmem:[#allocation8 + $0xe0] sm:$0xff]
    %v306 = vld [vmem:[#allocation8 + $0xe8] sm:$0xff]
    %v307 = vld [vmem:[#allocation8 + $0xf0] sm:$0xff]
    %v308 = vld [vmem:[#allocation8 + $0xf8] sm:$0xff]
    %v309 = vld [vmem:[%s6] sm:$0x3]
    %v311 = vlaneseq
    %v312 = vshrl.u32 %v311, 7
    %v313 = vsub.s32 0, %v312
    %v314 = vrot.slane %v309, %v313
    %v315 = vlaneseq
    %v316 = vshrl.u32 %v315, 7
    %v317 = vsub.s32 1, %v316
    %v318 = vrot.slane %v309, %v317
    %321 = vmatprep.subr.mxu0 %v308
    %322 = vmatpush1.msra.mxu0 %v307
    %323 = vmatprep.subr.mxu0 %v306
    %324 = vmatpush1.msra.mxu0 %v305
    %325 = vmatprep.subr.mxu0 %v304
    %326 = vmatpush1.msra.mxu0 %v303
    %327 = vmatprep.subr.mxu0 %v302
    %328 = vmatpush1.msra.mxu0 %v301
    %329 = vmatprep.subr.mxu0 %v300
    %330 = vmatpush1.msra.mxu0 %v299
    %331 = vmatprep.subr.mxu0 %v298
    %332 = vmatpush1.msra.mxu0 %v297
    %333 = vmatprep.subr.mxu0 %v296
    %334 = vmatpush1.msra.mxu0 %v295
    %335 = vmatprep.subr.mxu0 %v294
    %336 = vmatpush1.msra.mxu0 %v293
    %337 = vmatprep.subr.mxu0 %v292
    %338 = vmatpush1.msra.mxu0 %v291
    %339 = vmatprep.subr.mxu0 %v290
    %340 = vmatpush1.msra.mxu0 %v289
    %341 = vmatprep.subr.mxu0 %v288
    %342 = vmatpush1.msra.mxu0 %v287
    %343 = vmatprep.subr.mxu0 %v286
    %344 = vmatpush1.msra.mxu0 %v285
    %345 = vmatprep.subr.mxu0 %v284
    %346 = vmatpush1.msra.mxu0 %v283
    %347 = vmatprep.subr.mxu0 %v282
    %348 = vmatpush1.msra.mxu0 %v281
    %349 = vmatprep.subr.mxu0 %v280
    %350 = vmatpush1.msra.mxu0 %v279
    %351 = vmatprep.subr.mxu0 %v278
    %352 = vmatpush1.msra.mxu0 %v277
    %353 = vmatprep.subr.mxu0 0.0
    %354 = vmatpush2.msra.mxu0 0.0
    %355 = vmatprep.subr.mxu0 0.0
    %356 = vmatpush2.msra.mxu0 0.0
    %357 = vmatprep.subr.mxu0 0.0
    %358 = vmatpush2.msra.mxu0 0.0
    %359 = vmatprep.subr.mxu0 0.0
    %360 = vmatpush2.msra.mxu0 0.0
    %361 = vmatprep.subr.mxu0 0.0
    %362 = vmatpush2.msra.mxu0 0.0
    %363 = vmatprep.subr.mxu0 0.0
    %364 = vmatpush2.msra.mxu0 0.0
    %365 = vmatprep.subr.mxu0 0.0
    %366 = vmatpush2.msra.mxu0 0.0
    %367 = vmatprep.subr.mxu0 0.0
    %368 = vmatpush2.msra.mxu0 0.0
    %369 = vmatprep.subr.mxu0 0.0
    %370 = vmatpush2.msra.mxu0 0.0
    %371 = vmatprep.subr.mxu0 0.0
    %372 = vmatpush2.msra.mxu0 0.0
    %373 = vmatprep.subr.mxu0 0.0
    %374 = vmatpush2.msra.mxu0 0.0
    %375 = vmatprep.subr.mxu0 0.0
    %376 = vmatpush2.msra.mxu0 0.0
    %377 = vmatprep.subr.mxu0 0.0
    %378 = vmatpush2.msra.mxu0 0.0
    %379 = vmatprep.subr.mxu0 0.0
    %380 = vmatpush2.msra.mxu0 0.0
    %381 = vmatprep.subr.mxu0 0.0
    %382 = vmatpush2.msra.mxu0 0.0
    %383 = vmatprep.subr.mxu0 0.0
    %384 = vmatpush2.msra.mxu0 0.0
    %385 = vmatprep.mubr.f32.mxu0 0.0
    %386 = vmatmul.mubr.f32.gmra.mxu0 %v275
    %v387 = vpop.f32.mrf.mxu0
    %v388 = vadd.f32 %v314, %v387
    %v389 = vpop.f32.mrf.mxu0
    %v390 = vadd.f32 %v318, %v389
    %391 = vmatprep.mubr.f32.mxu0 0.0
    %392 = vmatmul.mubr.f32.gmra.mxu0 %v276
    %v393 = vpop.f32.mrf.mxu0
    %v394 = vadd.f32 %v314, %v393
    %v395 = vpop.f32.mrf.mxu0
    %v396 = vadd.f32 %v318, %v395
    %397 = vdwg.mxu0
    %398 = vst [vmem:[#allocation10] sm:$0xff] %v388
    %399 = vst [vmem:[#allocation10 + $0x8] sm:$0xff] %v390
    %400 = vst [vmem:[#allocation10 + $0x10] sm:$0xff] %v394
    %401 = vst [vmem:[#allocation10 + $0x18] sm:$0xff] %v396
    // Predicated region
    $region46: #{tpu_custom_call.1} parent=1 // pred_check
      _
    $region47: #{tpu_custom_call.1} parent=1 // pred_check_branch
      %403 = sbr.rel (0) target = $region49
    $region48: #{tpu_custom_call.1} parent=1 // pred_region
      %s405 = ssub.s32 512, 512
      %406 = vsyncadd [#allocation4], %s405
      %s407 = sshll.u32 [#allocation10], 4
      %s408 = int_to_ptr.vmem [resolvable:$true] %s407
      %413 = dma.vmem_to_hbm [thread:$0]  %s408, 512, %s7, [#allocation4], 256, 256, 16
    $region49: #{tpu_custom_call.1} parent=1 // pred_fallthru
      _
    // Predicated region
    $region50: #{tpu_custom_call.1} parent=1 // pred_check
      _
    $region51: #{tpu_custom_call.1} parent=1 // pred_check_branch
      %415 = sbr.rel (0) target = $region53
    $region52: #{tpu_custom_call.1} parent=1 // pred_region
      %416 = dma.done [#allocation4], 512
    $region53: #{tpu_custom_call.1} parent=1 // pred_fallthru
      _
    %417 = vsyncpa [#allocation3], 1
    %418 = vsyncpa [#allocation6], 1
    %419 = vsyncpa [#allocation9], 1
    %420 = vsyncpa [#allocation4], 1

</llo_original>
